<compile_context>
chip_gen: v7x
topology: tpu7x:2x2x1
jax: 0.10.0
libtpu: 0.0.40
codegen_flags: <defaults>
</compile_context>

<pallas_src>
import functools

import numpy as np
import jax
import jax.numpy as jnp
from jax import lax
from jax.experimental import pallas as pl
from jax.experimental.pallas import tpu as pltpu


def position_encoding_init(n_position: int, embedding_dim: int) -> jnp.ndarray:
    """Same sinusoid table as PositionEncoder.position_encoding_init (float32)."""
    pe = np.array(
        [[pos / np.power(10000, 2 * (j // 2) / embedding_dim)
          for j in range(embedding_dim)]
         for pos in range(n_position)],
        dtype=np.float64,
    )
    pe[:, 0::2] = np.sin(pe[:, 0::2])
    pe[:, 1::2] = np.cos(pe[:, 1::2])
    return jnp.asarray(pe, dtype=jnp.float32)


def _round_up(x: int, m: int) -> int:
    return ((x + m - 1) // m) * m


def _gather_tile_kernel(idx_ref, table_ref, out_ref, *, n_pos: int):
    # idx_ref:   (tn, 1)     int32  -- per-tile index stream (VMEM)
    # table_ref: (P_pad, D)  f32    -- full sinusoid table, resident & single-buffered
    # out_ref:   (tn, D)     f32    -- output tile
    tn = out_ref.shape[0]
    p_pad = table_ref.shape[0]

    # In-kernel clamp (nn.Embedding would raise on OOB; we remap to valid rows).
    idx = jnp.clip(idx_ref[...], 0, n_pos - 1)                           # (tn, 1)

    # One-hot gather on the MXU: (tn, P_pad) @ (P_pad, D) -> (tn, D).
    one_hot = (lax.broadcasted_iota(jnp.int32, (tn, p_pad), 1) == idx)
    one_hot = one_hot.astype(jnp.float32)                                # exact 0/1
    out_ref[...] = jnp.dot(
        one_hot, table_ref[...],
        preferred_element_type=jnp.float32,
        precision=lax.Precision.HIGHEST,   # keep f32 table exact through the MXU
    )


def position_encoder(x: jnp.ndarray, table: jnp.ndarray, *,
                     max_tile: int = 512, use_pallas=None) -> jnp.ndarray:
    """Pallas equivalent of PositionEncoder.forward: out[...] = table[x[...]]."""
    n_pos, d = table.shape
    table = table.astype(jnp.float32)
    orig_shape = x.shape
    flat = x.reshape(-1).astype(jnp.int32)
    n = int(flat.shape[0])

    # Generation-aware VMEM capacity (v5e/v6e: 128 MiB, v7x: 64 MiB).
    try:
        vmem_cap = int(pltpu.get_tpu_info().vmem_capacity_bytes)
    except Exception:
        vmem_cap = 64 << 20    # conservative (v7x)

    p_pad = _round_up(n_pos, 128)          # lane-dense one-hot / clean MXU contraction
    table_bytes = p_pad * d * 4
    table_fits = table_bytes <= int(0.6 * vmem_cap)

    if use_pallas is None:
        # Tiny outputs: pallas_call fixed overhead dominates; XLA gather is at roofline.
        use_pallas = n * d * 4 >= (256 << 10)

    if (not use_pallas) or (not table_fits) or n == 0:
        # TODO(synk): add a Pallas path that keeps an oversized table in HBM
        # (pl.BlockSpec(memory_space=pl.ANY)) with manual pltpu.make_async_copy row
        # gather for v7x tables that exceed VMEM; for now fall back to XLA gather.
        safe = jnp.clip(flat, 0, n_pos - 1)
        return jnp.take(table, safe, axis=0).reshape(*orig_shape, d)

    # Tile selection: rows are a multiple of 8; keep n_pad == n when n % 8 == 0 and
    # small (no post-kernel slice copy); split into >= 2 tiles for moderate n so both
    # v7x TensorCores get work.
    n8 = _round_up(n, 8)
    if n8 <= 256:
        tn = n8
    else:
        target_tiles = max(2, -(-n8 // max_tile))
        tn = min(max_tile, _round_up(-(-n8 // target_tiles), 8))
    num_tiles = -(-n8 // tn)
    n_pad = num_tiles * tn

    idx2d = jnp.pad(flat, (0, n_pad - n)).reshape(n_pad, 1) if n_pad != n \
        else flat.reshape(n_pad, 1)
    table_p = jnp.pad(table, ((0, p_pad - n_pos), (0, 0))) if p_pad != n_pos else table

    # VMEM budget: resident table (single-buffered) + double-buffered output / index
    # tiles + one-hot & iota temporaries + slack; floor at the scoped default, cap
    # with headroom under the physical capacity.
    vmem_needed = (table_bytes
                   + 2 * tn * d * 4          # output tiles (double-buffered)
                   + 2 * tn * 4              # index tiles (double-buffered)
                   + 2 * tn * p_pad * 4      # one-hot / iota temporaries
                   + (2 << 20))
    vmem_limit = int(min(max(vmem_needed, 32 << 20), int(0.85 * vmem_cap)))

    out = pl.pallas_call(
        functools.partial(_gather_tile_kernel, n_pos=n_pos),
        out_shape=jax.ShapeDtypeStruct((n_pad, d), jnp.float32),
        grid=(num_tiles,),
        in_specs=[
            pl.BlockSpec((tn, 1), lambda i: (i, 0)),             # per-tile index stream
            pl.BlockSpec(memory_space=pltpu.MemorySpace.VMEM),    # whole table, 1 copy
        ],
        out_specs=pl.BlockSpec((tn, d), lambda i: (i, 0)),
        compiler_params=pltpu.CompilerParams(
            dimension_semantics=("parallel",),   # independent token tiles (megacore)
            vmem_limit_bytes=vmem_limit,
        ),
    )(idx2d, table_p)

    if n_pad != n:
        out = out[:n]
    return out.reshape(*orig_shape, d)


if __name__ == "__main__":
    key = jax.random.PRNGKey(0)

    n_position = 64
    embedding_dim = 32
    table = position_encoding_init(n_position, embedding_dim)

    # x: integer position indices, batch=2, seq=8
    x = jax.random.randint(key, (2, 8), minval=0, maxval=n_position, dtype=jnp.int32)

    # Force the Pallas path at demo size (the auto heuristic would route tiny inputs
    # to the XLA-gather fast path).
    out = position_encoder(x, table, use_pallas=True)
    out = jax.block_until_ready(out)

    # Reference: plain JAX embedding lookup (== nn.Embedding forward)
    ref = jnp.take(table, x.reshape(-1), axis=0).reshape(2, 8, embedding_dim)
    assert out.shape == (2, 8, embedding_dim)
    assert out.dtype == jnp.float32
    np.testing.assert_allclose(np.asarray(out), np.asarray(ref), rtol=1e-6, atol=1e-6)

    print("KERNEL_OK")
</pallas_src>

<mosaic_0001>
module attributes {stable_mosaic.version = 11 : i64} {
  func.func @_gather_tile_kernel(%arg0: i32, %arg1: memref<16x1xi32, #tpu.memory_space<vmem>>, %arg2: memref<128x32xf32, #tpu.memory_space<vmem>>, %arg3: memref<16x32xf32, #tpu.memory_space<vmem>>) attributes {dimension_semantics = [#tpu.dimension_semantics<parallel>], iteration_bounds = array<i64: 1>, scalar_prefetch = 0 : i64, scratch_operands = 0 : i64, tpu.core_type = #tpu.core_type<tc>, window_params = [{transform_indices = @transform_0, window_bounds = array<i64: 16, 1>}, {pipeline_mode = #tpu.pipeline_mode<synchronous>, transform_indices = @transform_1, window_bounds = array<i64: 128, 32>}, {transform_indices = @transform_2, window_bounds = array<i64: 16, 32>}]} {
    %c0 = arith.constant 0 : index
    %c0_0 = arith.constant 0 : index
    %0 = vector.load %arg1[%c0, %c0_0] : memref<16x1xi32, #tpu.memory_space<vmem>>, vector<16x1xi32>
    %c0_i32 = arith.constant 0 : i32
    %c63_i32 = arith.constant 63 : i32
    %1 = vector.broadcast %c0_i32 : i32 to vector<16x1xi32>
    %2 = arith.maxsi %1, %0 : vector<16x1xi32>
    %3 = vector.broadcast %c63_i32 : i32 to vector<16x1xi32>
    %4 = arith.minsi %3, %2 : vector<16x1xi32>
    %5 = tpu.iota {dimensions = array<i32: 1>} : vector<16x128xi32>
    %6 = vector.broadcast %4 : vector<16x1xi32> to vector<16x128xi32>
    %7 = arith.cmpi eq, %5, %6 : vector<16x128xi32>
    %8 = arith.extui %7 : vector<16x128xi1> to vector<16x128xi32>
    %9 = arith.sitofp %8 : vector<16x128xi32> to vector<16x128xf32>
    %c0_1 = arith.constant 0 : index
    %c0_2 = arith.constant 0 : index
    %10 = vector.load %arg2[%c0_1, %c0_2] : memref<128x32xf32, #tpu.memory_space<vmem>>, vector<128x32xf32>
    %cst = arith.constant dense<0.000000e+00> : vector<16x32xf32>
    %11 = tpu.matmul %9, %10, %cst {dimension_numbers = #tpu.dot_dimension_numbers<[1], [0], [0], [1], [0, 0, 1, 1], [], []>, precision = #tpu.contract_precision<fp32>} : vector<16x128xf32>, vector<128x32xf32>, vector<16x32xf32> -> vector<16x32xf32>
    %c0_3 = arith.constant 0 : index
    %c0_4 = arith.constant 0 : index
    %12 = vector.load %arg3[%c0_3, %c0_4] : memref<16x32xf32, #tpu.memory_space<vmem>>, vector<16x32xf32>
    tpu.vector_store %arg3[%c0_3, %c0_4], %11 {strides = array<i32>} : memref<16x32xf32, #tpu.memory_space<vmem>>, vector<16x32xf32>,
    return
  }
  func.func @transform_0(%arg0: i32) -> (i32, i32) {
    %c0_i32 = arith.constant 0 : i32
    %c0_i32_0 = arith.constant 0 : i32
    return %arg0, %c0_i32 : i32, i32
  }
  func.func @transform_1(%arg0: i32) -> (i32, i32) {
    %c0_i32 = arith.constant 0 : i32
    %c0_i32_0 = arith.constant 0 : i32
    %c0_i32_1 = arith.constant 0 : i32
    return %c0_i32, %c0_i32_0 : i32, i32
  }
  func.func @transform_2(%arg0: i32) -> (i32, i32) {
    %c0_i32 = arith.constant 0 : i32
    %c0_i32_0 = arith.constant 0 : i32
    return %arg0, %c0_i32 : i32, i32
  }
}

</mosaic_0001>

<llo_original>
// kernel: tpu_custom_call.1
$region0: #{tpu_custom_call.1}
  #allocation0 [shape = 'u32[]', space=smem, size = 0x4, offset = 0x4, fixed_abs, tag = 'smem constant byte address 0x4 - core index']
  #allocation1 [shape = 'u32[144,128]{1,0:T(1,128)}', space=vmem, size = 0x12000, scoped, tag = 'internal scratch']
  %s0 = inlined_call_operand.vmem [shape: s32[16,1], index: 0, kind: input, shape index: {}]
  %s1 = inlined_call_operand.vmem [shape: f32[128,32], index: 1, kind: input, shape index: {}]
  %s2 = inlined_call_operand.hbm [shape: f32[16,32], index: 2, kind: output, shape index: {}]
  %s3 = sld [smem:[#allocation0]]
  $region18: #{tpu_custom_call.1} parent=0
    _
  %s5 = ssub.s32 1, %s3
  %s6 = scalar_select 0, %s5, %s3
  $region1: #{tpu_custom_call.1} parent=0
    #allocation2 [shape = 'u8[8192]{0}', space=vmem, size = 0x2000, scoped, tag = 'output window, operand 0, single buffered']
    #allocation3 [shape = 's32[1]{0}', space=sflag, size = 0x4, scoped, tag = 'scoped memory for tpu_custom_call.1']
    %7 = vsyncpa [#allocation3], 0
    // Predicated region
    $region2: #{tpu_custom_call.1} parent=1 // pred_check
      _
    $region3: #{tpu_custom_call.1} parent=1 // pred_check_branch
      %9 = sbr.rel (0) target = $region5
    $region4: #{tpu_custom_call.1} parent=1 // pred_region
      _
    $region5: #{tpu_custom_call.1} parent=1 // pred_fallthru
      _
    // Predicated region
    $region6: #{tpu_custom_call.1} parent=1 // pred_check
      _
    $region7: #{tpu_custom_call.1} parent=1 // pred_check_branch
      %11 = sbr.rel (0) target = $region9
    $region8: #{tpu_custom_call.1} parent=1 // pred_region
      _
    $region9: #{tpu_custom_call.1} parent=1 // pred_fallthru
      _
    %v12 = vld [vmem:[%s0] sm:$0xff]
    %v13 = vld [vmem:[%s0 + $0x8] sm:$0xff]
    %vm14 = vcmp.gt.s32.totalorder %v12, 0
    %v15 = vsel %vm14, %v12, 0
    %vm16 = vcmp.gt.s32.totalorder %v13, 0
    %v17 = vsel %vm16, %v13, 0
    %vm18 = vcmp.lt.s32.totalorder %v15, 63
    %v19 = vsel %vm18, %v15, 63
    %vm20 = vcmp.lt.s32.totalorder %v17, 63
    %v21 = vsel %vm20, %v17, 63
    %v22 = vlaneseq
    %v23 = vand.u32 %v22, 127
    %24 = vset.pattern.permute.xlu0 0
    %25 = vperm.xlu0 %24, %v19
    %v26 = vpop.permute.xlu0 %25
    %27 = vset.pattern.permute.xlu0 0
    %28 = vperm.xlu0 %27, %v21
    %v29 = vpop.permute.xlu0 %28
    %vm30 = vcmp.eq.s32.totalorder %v23, %v26
    %vm31 = vcmp.eq.s32.totalorder %v23, %v29
    %v32 = vsel %vm30, 1, 0
    %v33 = vsel %vm31, 1, 0
    %v34 = vcvt.s32.f32 %v32
    %v35 = vcvt.s32.f32 %v33
    %v36 = vld [vmem:[%s1] sm:$0xff]
    %v37 = vld [vmem:[%s1 + $0x8] sm:$0xff]
    %v38 = vld [vmem:[%s1 + $0x10] sm:$0xff]
    %v39 = vld [vmem:[%s1 + $0x18] sm:$0xff]
    %v40 = vld [vmem:[%s1 + $0x20] sm:$0xff]
    %v41 = vld [vmem:[%s1 + $0x28] sm:$0xff]
    %v42 = vld [vmem:[%s1 + $0x30] sm:$0xff]
    %v43 = vld [vmem:[%s1 + $0x38] sm:$0xff]
    %v44 = vld [vmem:[%s1 + $0x40] sm:$0xff]
    %v45 = vld [vmem:[%s1 + $0x48] sm:$0xff]
    %v46 = vld [vmem:[%s1 + $0x50] sm:$0xff]
    %v47 = vld [vmem:[%s1 + $0x58] sm:$0xff]
    %v48 = vld [vmem:[%s1 + $0x60] sm:$0xff]
    %v49 = vld [vmem:[%s1 + $0x68] sm:$0xff]
    %v50 = vld [vmem:[%s1 + $0x70] sm:$0xff]
    %v51 = vld [vmem:[%s1 + $0x78] sm:$0xff]
    %52 = vmatprep.subr.mxu0 0.0
    %v53 = vand.u32 %v36, 4294901760
    %54 = vmatpush1.msra.mxu0 %v53
    %55 = vmatprep.subr.mxu0 0.0
    %v56 = vand.u32 %v37, 4294901760
    %57 = vmatpush1.msra.mxu0 %v56
    %58 = vmatprep.subr.mxu0 0.0
    %v59 = vand.u32 %v38, 4294901760
    %60 = vmatpush1.msra.mxu0 %v59
    %61 = vmatprep.subr.mxu0 0.0
    %v62 = vand.u32 %v39, 4294901760
    %63 = vmatpush1.msra.mxu0 %v62
    %64 = vmatprep.subr.mxu0 0.0
    %v65 = vand.u32 %v40, 4294901760
    %66 = vmatpush1.msra.mxu0 %v65
    %67 = vmatprep.subr.mxu0 0.0
    %v68 = vand.u32 %v41, 4294901760
    %69 = vmatpush1.msra.mxu0 %v68
    %70 = vmatprep.subr.mxu0 0.0
    %v71 = vand.u32 %v42, 4294901760
    %72 = vmatpush1.msra.mxu0 %v71
    %73 = vmatprep.subr.mxu0 0.0
    %v74 = vand.u32 %v43, 4294901760
    %75 = vmatpush1.msra.mxu0 %v74
    %76 = vmatprep.subr.mxu0 0.0
    %v77 = vand.u32 %v44, 4294901760
    %78 = vmatpush1.msra.mxu0 %v77
    %79 = vmatprep.subr.mxu0 0.0
    %v80 = vand.u32 %v45, 4294901760
    %81 = vmatpush1.msra.mxu0 %v80
    %82 = vmatprep.subr.mxu0 0.0
    %v83 = vand.u32 %v46, 4294901760
    %84 = vmatpush1.msra.mxu0 %v83
    %85 = vmatprep.subr.mxu0 0.0
    %v86 = vand.u32 %v47, 4294901760
    %87 = vmatpush1.msra.mxu0 %v86
    %88 = vmatprep.subr.mxu0 0.0
    %v89 = vand.u32 %v48, 4294901760
    %90 = vmatpush1.msra.mxu0 %v89
    %91 = vmatprep.subr.mxu0 0.0
    %v92 = vand.u32 %v49, 4294901760
    %93 = vmatpush1.msra.mxu0 %v92
    %94 = vmatprep.subr.mxu0 0.0
    %v95 = vand.u32 %v50, 4294901760
    %96 = vmatpush1.msra.mxu0 %v95
    %97 = vmatprep.subr.mxu0 0.0
    %v98 = vand.u32 %v51, 4294901760
    %99 = vmatpush1.msra.mxu0 %v98
    %100 = vmatprep.subr.mxu0 0.0
    %101 = vmatpush1.msra.mxu0 0.0
    %102 = vmatprep.subr.mxu0 0.0
    %103 = vmatpush1.msra.mxu0 0.0
    %104 = vmatprep.subr.mxu0 0.0
    %105 = vmatpush1.msra.mxu0 0.0
    %106 = vmatprep.subr.mxu0 0.0
    %107 = vmatpush1.msra.mxu0 0.0
    %108 = vmatprep.subr.mxu0 0.0
    %109 = vmatpush1.msra.mxu0 0.0
    %110 = vmatprep.subr.mxu0 0.0
    %111 = vmatpush1.msra.mxu0 0.0
    %112 = vmatprep.subr.mxu0 0.0
    %113 = vmatpush1.msra.mxu0 0.0
    %114 = vmatprep.subr.mxu0 0.0
    %115 = vmatpush1.msra.mxu0 0.0
    %116 = vmatprep.subr.mxu0 0.0
    %117 = vmatpush1.msra.mxu0 0.0
    %118 = vmatprep.subr.mxu0 0.0
    %119 = vmatpush1.msra.mxu0 0.0
    %120 = vmatprep.subr.mxu0 0.0
    %121 = vmatpush1.msra.mxu0 0.0
    %122 = vmatprep.subr.mxu0 0.0
    %123 = vmatpush1.msra.mxu0 0.0
    %124 = vmatprep.subr.mxu0 0.0
    %125 = vmatpush1.msra.mxu0 0.0
    %126 = vmatprep.subr.mxu0 0.0
    %127 = vmatpush1.msra.mxu0 0.0
    %128 = vmatprep.subr.mxu0 0.0
    %129 = vmatpush1.msra.mxu0 0.0
    %130 = vmatprep.subr.mxu0 0.0
    %131 = vmatpush1.msra.mxu0 0.0
    %132 = vmatprep.mubr.f32.mxu0 0.0
    %v133 = vand.u32 %v34, 4294901760
    %v134 = vsub.f32 %v34, %v133
    %v135 = vand.u32 %v134, 4294901760
    %v136 = vsub.f32 %v134, %v135
    %v137 = vand.u32 %v136, 4294901760
    %138 = vmatmul.mubr.f32.gmra.mrb[0].mxu0 %v137
    %v139 = vpop.f32.mrb[0].mxu0
    %v140 = vadd.f32 0.0, %v139
    %v141 = vpop.f32.mrb[0].mxu0
    %142 = vmatprep.mubr.f32.mxu0 0.0
    %v143 = vand.u32 %v35, 4294901760
    %v144 = vsub.f32 %v35, %v143
    %v145 = vand.u32 %v144, 4294901760
    %v146 = vsub.f32 %v144, %v145
    %v147 = vand.u32 %v146, 4294901760
    %148 = vmatmul.mubr.f32.gmra.mrb[0].mxu0 %v147
    %v149 = vpop.f32.mrb[0].mxu0
    %v150 = vadd.f32 0.0, %v149
    %v151 = vpop.f32.mrb[0].mxu0
    %152 = vdwg.mxu0
    %153 = vmatprep.subr.mxu0 0.0
    %v154 = vand.u32 %v36, 4294901760
    %v155 = vsub.f32 %v36, %v154
    %v156 = vand.u32 %v155, 4294901760
    %v157 = vsub.f32 %v155, %v156
    %v158 = vand.u32 %v157, 4294901760
    %159 = vmatpush1.msra.mxu0 %v158
    %160 = vmatprep.subr.mxu0 0.0
    %v161 = vand.u32 %v37, 4294901760
    %v162 = vsub.f32 %v37, %v161
    %v163 = vand.u32 %v162, 4294901760
    %v164 = vsub.f32 %v162, %v163
    %v165 = vand.u32 %v164, 4294901760
    %166 = vmatpush1.msra.mxu0 %v165
    %167 = vmatprep.subr.mxu0 0.0
    %v168 = vand.u32 %v38, 4294901760
    %v169 = vsub.f32 %v38, %v168
    %v170 = vand.u32 %v169, 4294901760
    %v171 = vsub.f32 %v169, %v170
    %v172 = vand.u32 %v171, 4294901760
    %173 = vmatpush1.msra.mxu0 %v172
    %174 = vmatprep.subr.mxu0 0.0
    %v175 = vand.u32 %v39, 4294901760
    %v176 = vsub.f32 %v39, %v175
    %v177 = vand.u32 %v176, 4294901760
    %v178 = vsub.f32 %v176, %v177
    %v179 = vand.u32 %v178, 4294901760
    %180 = vmatpush1.msra.mxu0 %v179
    %181 = vmatprep.subr.mxu0 0.0
    %v182 = vand.u32 %v40, 4294901760
    %v183 = vsub.f32 %v40, %v182
    %v184 = vand.u32 %v183, 4294901760
    %v185 = vsub.f32 %v183, %v184
    %v186 = vand.u32 %v185, 4294901760
    %187 = vmatpush1.msra.mxu0 %v186
    %188 = vmatprep.subr.mxu0 0.0
    %v189 = vand.u32 %v41, 4294901760
    %v190 = vsub.f32 %v41, %v189
    %v191 = vand.u32 %v190, 4294901760
    %v192 = vsub.f32 %v190, %v191
    %v193 = vand.u32 %v192, 4294901760
    %194 = vmatpush1.msra.mxu0 %v193
    %195 = vmatprep.subr.mxu0 0.0
    %v196 = vand.u32 %v42, 4294901760
    %v197 = vsub.f32 %v42, %v196
    %v198 = vand.u32 %v197, 4294901760
    %v199 = vsub.f32 %v197, %v198
    %v200 = vand.u32 %v199, 4294901760
    %201 = vmatpush1.msra.mxu0 %v200
    %202 = vmatprep.subr.mxu0 0.0
    %v203 = vand.u32 %v43, 4294901760
    %v204 = vsub.f32 %v43, %v203
    %v205 = vand.u32 %v204, 4294901760
    %v206 = vsub.f32 %v204, %v205
    %v207 = vand.u32 %v206, 4294901760
    %208 = vmatpush1.msra.mxu0 %v207
    %209 = vmatprep.subr.mxu0 0.0
    %v210 = vand.u32 %v44, 4294901760
    %v211 = vsub.f32 %v44, %v210
    %v212 = vand.u32 %v211, 4294901760
    %v213 = vsub.f32 %v211, %v212
    %v214 = vand.u32 %v213, 4294901760
    %215 = vmatpush1.msra.mxu0 %v214
    %216 = vmatprep.subr.mxu0 0.0
    %v217 = vand.u32 %v45, 4294901760
    %v218 = vsub.f32 %v45, %v217
    %v219 = vand.u32 %v218, 4294901760
    %v220 = vsub.f32 %v218, %v219
    %v221 = vand.u32 %v220, 4294901760
    %222 = vmatpush1.msra.mxu0 %v221
    %223 = vmatprep.subr.mxu0 0.0
    %v224 = vand.u32 %v46, 4294901760
    %v225 = vsub.f32 %v46, %v224
    %v226 = vand.u32 %v225, 4294901760
    %v227 = vsub.f32 %v225, %v226
    %v228 = vand.u32 %v227, 4294901760
    %229 = vmatpush1.msra.mxu0 %v228
    %230 = vmatprep.subr.mxu0 0.0
    %v231 = vand.u32 %v47, 4294901760
    %v232 = vsub.f32 %v47, %v231
    %v233 = vand.u32 %v232, 4294901760
    %v234 = vsub.f32 %v232, %v233
    %v235 = vand.u32 %v234, 4294901760
    %236 = vmatpush1.msra.mxu0 %v235
    %237 = vmatprep.subr.mxu0 0.0
    %v238 = vand.u32 %v48, 4294901760
    %v239 = vsub.f32 %v48, %v238
    %v240 = vand.u32 %v239, 4294901760
    %v241 = vsub.f32 %v239, %v240
    %v242 = vand.u32 %v241, 4294901760
    %243 = vmatpush1.msra.mxu0 %v242
    %244 = vmatprep.subr.mxu0 0.0
    %v245 = vand.u32 %v49, 4294901760
    %v246 = vsub.f32 %v49, %v245
    %v247 = vand.u32 %v246, 4294901760
    %v248 = vsub.f32 %v246, %v247
    %v249 = vand.u32 %v248, 4294901760
    %250 = vmatpush1.msra.mxu0 %v249
    %251 = vmatprep.subr.mxu0 0.0
    %v252 = vand.u32 %v50, 4294901760
    %v253 = vsub.f32 %v50, %v252
    %v254 = vand.u32 %v253, 4294901760
    %v255 = vsub.f32 %v253, %v254
    %v256 = vand.u32 %v255, 4294901760
    %257 = vmatpush1.msra.mxu0 %v256
    %258 = vmatprep.subr.mxu0 0.0
    %v259 = vand.u32 %v51, 4294901760
    %v260 = vsub.f32 %v51, %v259
    %v261 = vand.u32 %v260, 4294901760
    %v262 = vsub.f32 %v260, %v261
    %v263 = vand.u32 %v262, 4294901760
    %264 = vmatpush1.msra.mxu0 %v263
    %265 = vmatprep.subr.mxu0 0.0
    %266 = vmatpush1.msra.mxu0 0.0
    %267 = vmatprep.subr.mxu0 0.0
    %268 = vmatpush1.msra.mxu0 0.0
    %269 = vmatprep.subr.mxu0 0.0
    %270 = vmatpush1.msra.mxu0 0.0
    %271 = vmatprep.subr.mxu0 0.0
    %272 = vmatpush1.msra.mxu0 0.0
    %273 = vmatprep.subr.mxu0 0.0
    %274 = vmatpush1.msra.mxu0 0.0
    %275 = vmatprep.subr.mxu0 0.0
    %276 = vmatpush1.msra.mxu0 0.0
    %277 = vmatprep.subr.mxu0 0.0
    %278 = vmatpush1.msra.mxu0 0.0
    %279 = vmatprep.subr.mxu0 0.0
    %280 = vmatpush1.msra.mxu0 0.0
    %281 = vmatprep.subr.mxu0 0.0
    %282 = vmatpush1.msra.mxu0 0.0
    %283 = vmatprep.subr.mxu0 0.0
    %284 = vmatpush1.msra.mxu0 0.0
    %285 = vmatprep.subr.mxu0 0.0
    %286 = vmatpush1.msra.mxu0 0.0
    %287 = vmatprep.subr.mxu0 0.0
    %288 = vmatpush1.msra.mxu0 0.0
    %289 = vmatprep.subr.mxu0 0.0
    %290 = vmatpush1.msra.mxu0 0.0
    %291 = vmatprep.subr.mxu0 0.0
    %292 = vmatpush1.msra.mxu0 0.0
    %293 = vmatprep.subr.mxu0 0.0
    %294 = vmatpush1.msra.mxu0 0.0
    %295 = vmatprep.subr.mxu0 0.0
    %296 = vmatpush1.msra.mxu0 0.0
    %297 = vmatprep.mubr.f32.mxu0 0.0
    %v298 = vand.u32 %v34, 4294901760
    %299 = vmatmul.mubr.f32.gmra.mrb[0].mxu0 %v298
    %v300 = vpop.f32.mrb[0].mxu0
    %v301 = vadd.f32 %v140, %v300
    %v302 = vpop.f32.mrb[0].mxu0
    %303 = vmatprep.mubr.f32.mxu0 0.0
    %v304 = vand.u32 %v35, 4294901760
    %305 = vmatmul.mubr.f32.gmra.mrb[0].mxu0 %v304
    %v306 = vpop.f32.mrb[0].mxu0
    %v307 = vadd.f32 %v150, %v306
    %v308 = vpop.f32.mrb[0].mxu0
    %309 = vdwg.mxu0
    %310 = vmatprep.subr.mxu0 0.0
    %v311 = vand.u32 %v36, 4294901760
    %v312 = vsub.f32 %v36, %v311
    %313 = vmatpush1.msra.mxu0 %v312
    %314 = vmatprep.subr.mxu0 0.0
    %v315 = vand.u32 %v37, 4294901760
    %v316 = vsub.f32 %v37, %v315
    %317 = vmatpush1.msra.mxu0 %v316
    %318 = vmatprep.subr.mxu0 0.0
    %v319 = vand.u32 %v38, 4294901760
    %v320 = vsub.f32 %v38, %v319
    %321 = vmatpush1.msra.mxu0 %v320
    %322 = vmatprep.subr.mxu0 0.0
    %v323 = vand.u32 %v39, 4294901760
    %v324 = vsub.f32 %v39, %v323
    %325 = vmatpush1.msra.mxu0 %v324
    %326 = vmatprep.subr.mxu0 0.0
    %v327 = vand.u32 %v40, 4294901760
    %v328 = vsub.f32 %v40, %v327
    %329 = vmatpush1.msra.mxu0 %v328
    %330 = vmatprep.subr.mxu0 0.0
    %v331 = vand.u32 %v41, 4294901760
    %v332 = vsub.f32 %v41, %v331
    %333 = vmatpush1.msra.mxu0 %v332
    %334 = vmatprep.subr.mxu0 0.0
    %v335 = vand.u32 %v42, 4294901760
    %v336 = vsub.f32 %v42, %v335
    %337 = vmatpush1.msra.mxu0 %v336
    %338 = vmatprep.subr.mxu0 0.0
    %v339 = vand.u32 %v43, 4294901760
    %v340 = vsub.f32 %v43, %v339
    %341 = vmatpush1.msra.mxu0 %v340
    %342 = vmatprep.subr.mxu0 0.0
    %v343 = vand.u32 %v44, 4294901760
    %v344 = vsub.f32 %v44, %v343
    %345 = vmatpush1.msra.mxu0 %v344
    %346 = vmatprep.subr.mxu0 0.0
    %v347 = vand.u32 %v45, 4294901760
    %v348 = vsub.f32 %v45, %v347
    %349 = vmatpush1.msra.mxu0 %v348
    %350 = vmatprep.subr.mxu0 0.0
    %v351 = vand.u32 %v46, 4294901760
    %v352 = vsub.f32 %v46, %v351
    %353 = vmatpush1.msra.mxu0 %v352
    %354 = vmatprep.subr.mxu0 0.0
    %v355 = vand.u32 %v47, 4294901760
    %v356 = vsub.f32 %v47, %v355
    %357 = vmatpush1.msra.mxu0 %v356
    %358 = vmatprep.subr.mxu0 0.0
    %v359 = vand.u32 %v48, 4294901760
    %v360 = vsub.f32 %v48, %v359
    %361 = vmatpush1.msra.mxu0 %v360
    %362 = vmatprep.subr.mxu0 0.0
    %v363 = vand.u32 %v49, 4294901760
    %v364 = vsub.f32 %v49, %v363
    %365 = vmatpush1.msra.mxu0 %v364
    %366 = vmatprep.subr.mxu0 0.0
    %v367 = vand.u32 %v50, 4294901760
    %v368 = vsub.f32 %v50, %v367
    %369 = vmatpush1.msra.mxu0 %v368
    %370 = vmatprep.subr.mxu0 0.0
    %v371 = vand.u32 %v51, 4294901760
    %v372 = vsub.f32 %v51, %v371
    %373 = vmatpush1.msra.mxu0 %v372
    %374 = vmatprep.subr.mxu0 0.0
    %375 = vmatpush1.msra.mxu0 0.0
    %376 = vmatprep.subr.mxu0 0.0
    %377 = vmatpush1.msra.mxu0 0.0
    %378 = vmatprep.subr.mxu0 0.0
    %379 = vmatpush1.msra.mxu0 0.0
    %380 = vmatprep.subr.mxu0 0.0
    %381 = vmatpush1.msra.mxu0 0.0
    %382 = vmatprep.subr.mxu0 0.0
    %383 = vmatpush1.msra.mxu0 0.0
    %384 = vmatprep.subr.mxu0 0.0
    %385 = vmatpush1.msra.mxu0 0.0
    %386 = vmatprep.subr.mxu0 0.0
    %387 = vmatpush1.msra.mxu0 0.0
    %388 = vmatprep.subr.mxu0 0.0
    %389 = vmatpush1.msra.mxu0 0.0
    %390 = vmatprep.subr.mxu0 0.0
    %391 = vmatpush1.msra.mxu0 0.0
    %392 = vmatprep.subr.mxu0 0.0
    %393 = vmatpush1.msra.mxu0 0.0
    %394 = vmatprep.subr.mxu0 0.0
    %395 = vmatpush1.msra.mxu0 0.0
    %396 = vmatprep.subr.mxu0 0.0
    %397 = vmatpush1.msra.mxu0 0.0
    %398 = vmatprep.subr.mxu0 0.0
    %399 = vmatpush1.msra.mxu0 0.0
    %400 = vmatprep.subr.mxu0 0.0
    %401 = vmatpush1.msra.mxu0 0.0
    %402 = vmatprep.subr.mxu0 0.0
    %403 = vmatpush1.msra.mxu0 0.0
    %404 = vmatprep.subr.mxu0 0.0
    %405 = vmatpush1.msra.mxu0 0.0
    %406 = vmatprep.mubr.f32.mxu0 0.0
    %v407 = vand.u32 %v34, 4294901760
    %v408 = vsub.f32 %v34, %v407
    %409 = vmatmul.mubr.f32.gmra.mrb[0].mxu0 %v408
    %v410 = vpop.f32.mrb[0].mxu0
    %v411 = vadd.f32 %v301, %v410
    %v412 = vpop.f32.mrb[0].mxu0
    %413 = vmatprep.mubr.f32.mxu0 0.0
    %v414 = vand.u32 %v35, 4294901760
    %v415 = vsub.f32 %v35, %v414
    %416 = vmatmul.mubr.f32.gmra.mrb[0].mxu0 %v415
    %v417 = vpop.f32.mrb[0].mxu0
    %v418 = vadd.f32 %v307, %v417
    %v419 = vpop.f32.mrb[0].mxu0
    %420 = vdwg.mxu0
    %421 = vmatprep.subr.mxu0 0.0
    %v422 = vand.u32 %v36, 4294901760
    %423 = vmatpush1.msra.mxu0 %v422
    %424 = vmatprep.subr.mxu0 0.0
    %v425 = vand.u32 %v37, 4294901760
    %426 = vmatpush1.msra.mxu0 %v425
    %427 = vmatprep.subr.mxu0 0.0
    %v428 = vand.u32 %v38, 4294901760
    %429 = vmatpush1.msra.mxu0 %v428
    %430 = vmatprep.subr.mxu0 0.0
    %v431 = vand.u32 %v39, 4294901760
    %432 = vmatpush1.msra.mxu0 %v431
    %433 = vmatprep.subr.mxu0 0.0
    %v434 = vand.u32 %v40, 4294901760
    %435 = vmatpush1.msra.mxu0 %v434
    %436 = vmatprep.subr.mxu0 0.0
    %v437 = vand.u32 %v41, 4294901760
    %438 = vmatpush1.msra.mxu0 %v437
    %439 = vmatprep.subr.mxu0 0.0
    %v440 = vand.u32 %v42, 4294901760
    %441 = vmatpush1.msra.mxu0 %v440
    %442 = vmatprep.subr.mxu0 0.0
    %v443 = vand.u32 %v43, 4294901760
    %444 = vmatpush1.msra.mxu0 %v443
    %445 = vmatprep.subr.mxu0 0.0
    %v446 = vand.u32 %v44, 4294901760
    %447 = vmatpush1.msra.mxu0 %v446
    %448 = vmatprep.subr.mxu0 0.0
    %v449 = vand.u32 %v45, 4294901760
    %450 = vmatpush1.msra.mxu0 %v449
    %451 = vmatprep.subr.mxu0 0.0
    %v452 = vand.u32 %v46, 4294901760
    %453 = vmatpush1.msra.mxu0 %v452
    %454 = vmatprep.subr.mxu0 0.0
    %v455 = vand.u32 %v47, 4294901760
    %456 = vmatpush1.msra.mxu0 %v455
    %457 = vmatprep.subr.mxu0 0.0
    %v458 = vand.u32 %v48, 4294901760
    %459 = vmatpush1.msra.mxu0 %v458
    %460 = vmatprep.subr.mxu0 0.0
    %v461 = vand.u32 %v49, 4294901760
    %462 = vmatpush1.msra.mxu0 %v461
    %463 = vmatprep.subr.mxu0 0.0
    %v464 = vand.u32 %v50, 4294901760
    %465 = vmatpush1.msra.mxu0 %v464
    %466 = vmatprep.subr.mxu0 0.0
    %v467 = vand.u32 %v51, 4294901760
    %468 = vmatpush1.msra.mxu0 %v467
    %469 = vmatprep.subr.mxu0 0.0
    %470 = vmatpush1.msra.mxu0 0.0
    %471 = vmatprep.subr.mxu0 0.0
    %472 = vmatpush1.msra.mxu0 0.0
    %473 = vmatprep.subr.mxu0 0.0
    %474 = vmatpush1.msra.mxu0 0.0
    %475 = vmatprep.subr.mxu0 0.0
    %476 = vmatpush1.msra.mxu0 0.0
    %477 = vmatprep.subr.mxu0 0.0
    %478 = vmatpush1.msra.mxu0 0.0
    %479 = vmatprep.subr.mxu0 0.0
    %480 = vmatpush1.msra.mxu0 0.0
    %481 = vmatprep.subr.mxu0 0.0
    %482 = vmatpush1.msra.mxu0 0.0
    %483 = vmatprep.subr.mxu0 0.0
    %484 = vmatpush1.msra.mxu0 0.0
    %485 = vmatprep.subr.mxu0 0.0
    %486 = vmatpush1.msra.mxu0 0.0
    %487 = vmatprep.subr.mxu0 0.0
    %488 = vmatpush1.msra.mxu0 0.0
    %489 = vmatprep.subr.mxu0 0.0
    %490 = vmatpush1.msra.mxu0 0.0
    %491 = vmatprep.subr.mxu0 0.0
    %492 = vmatpush1.msra.mxu0 0.0
    %493 = vmatprep.subr.mxu0 0.0
    %494 = vmatpush1.msra.mxu0 0.0
    %495 = vmatprep.subr.mxu0 0.0
    %496 = vmatpush1.msra.mxu0 0.0
    %497 = vmatprep.subr.mxu0 0.0
    %498 = vmatpush1.msra.mxu0 0.0
    %499 = vmatprep.subr.mxu0 0.0
    %500 = vmatpush1.msra.mxu0 0.0
    %501 = vmatprep.mubr.f32.mxu0 0.0
    %v502 = vand.u32 %v34, 4294901760
    %v503 = vsub.f32 %v34, %v502
    %v504 = vand.u32 %v503, 4294901760
    %505 = vmatmul.mubr.f32.gmra.mrb[0].mxu0 %v504
    %v506 = vpop.f32.mrb[0].mxu0
    %v507 = vadd.f32 %v411, %v506
    %v508 = vpop.f32.mrb[0].mxu0
    %509 = vmatprep.mubr.f32.mxu0 0.0
    %v510 = vand.u32 %v35, 4294901760
    %v511 = vsub.f32 %v35, %v510
    %v512 = vand.u32 %v511, 4294901760
    %513 = vmatmul.mubr.f32.gmra.mrb[0].mxu0 %v512
    %v514 = vpop.f32.mrb[0].mxu0
    %v515 = vadd.f32 %v418, %v514
    %v516 = vpop.f32.mrb[0].mxu0
    %517 = vdwg.mxu0
    %518 = vmatprep.subr.mxu0 0.0
    %v519 = vand.u32 %v36, 4294901760
    %v520 = vsub.f32 %v36, %v519
    %v521 = vand.u32 %v520, 4294901760
    %522 = vmatpush1.msra.mxu0 %v521
    %523 = vmatprep.subr.mxu0 0.0
    %v524 = vand.u32 %v37, 4294901760
    %v525 = vsub.f32 %v37, %v524
    %v526 = vand.u32 %v525, 4294901760
    %527 = vmatpush1.msra.mxu0 %v526
    %528 = vmatprep.subr.mxu0 0.0
    %v529 = vand.u32 %v38, 4294901760
    %v530 = vsub.f32 %v38, %v529
    %v531 = vand.u32 %v530, 4294901760
    %532 = vmatpush1.msra.mxu0 %v531
    %533 = vmatprep.subr.mxu0 0.0
    %v534 = vand.u32 %v39, 4294901760
    %v535 = vsub.f32 %v39, %v534
    %v536 = vand.u32 %v535, 4294901760
    %537 = vmatpush1.msra.mxu0 %v536
    %538 = vmatprep.subr.mxu0 0.0
    %v539 = vand.u32 %v40, 4294901760
    %v540 = vsub.f32 %v40, %v539
    %v541 = vand.u32 %v540, 4294901760
    %542 = vmatpush1.msra.mxu0 %v541
    %543 = vmatprep.subr.mxu0 0.0
    %v544 = vand.u32 %v41, 4294901760
    %v545 = vsub.f32 %v41, %v544
    %v546 = vand.u32 %v545, 4294901760
    %547 = vmatpush1.msra.mxu0 %v546
    %548 = vmatprep.subr.mxu0 0.0
    %v549 = vand.u32 %v42, 4294901760
    %v550 = vsub.f32 %v42, %v549
    %v551 = vand.u32 %v550, 4294901760
    %552 = vmatpush1.msra.mxu0 %v551
    %553 = vmatprep.subr.mxu0 0.0
    %v554 = vand.u32 %v43, 4294901760
    %v555 = vsub.f32 %v43, %v554
    %v556 = vand.u32 %v555, 4294901760
    %557 = vmatpush1.msra.mxu0 %v556
    %558 = vmatprep.subr.mxu0 0.0
    %v559 = vand.u32 %v44, 4294901760
    %v560 = vsub.f32 %v44, %v559
    %v561 = vand.u32 %v560, 4294901760
    %562 = vmatpush1.msra.mxu0 %v561
    %563 = vmatprep.subr.mxu0 0.0
    %v564 = vand.u32 %v45, 4294901760
    %v565 = vsub.f32 %v45, %v564
    %v566 = vand.u32 %v565, 4294901760
    %567 = vmatpush1.msra.mxu0 %v566
    %568 = vmatprep.subr.mxu0 0.0
    %v569 = vand.u32 %v46, 4294901760
    %v570 = vsub.f32 %v46, %v569
    %v571 = vand.u32 %v570, 4294901760
    %572 = vmatpush1.msra.mxu0 %v571
    %573 = vmatprep.subr.mxu0 0.0
    %v574 = vand.u32 %v47, 4294901760
    %v575 = vsub.f32 %v47, %v574
    %v576 = vand.u32 %v575, 4294901760
    %577 = vmatpush1.msra.mxu0 %v576
    %578 = vmatprep.subr.mxu0 0.0
    %v579 = vand.u32 %v48, 4294901760
    %v580 = vsub.f32 %v48, %v579
    %v581 = vand.u32 %v580, 4294901760
    %582 = vmatpush1.msra.mxu0 %v581
    %583 = vmatprep.subr.mxu0 0.0
    %v584 = vand.u32 %v49, 4294901760
    %v585 = vsub.f32 %v49, %v584
    %v586 = vand.u32 %v585, 4294901760
    %587 = vmatpush1.msra.mxu0 %v586
    %588 = vmatprep.subr.mxu0 0.0
    %v589 = vand.u32 %v50, 4294901760
    %v590 = vsub.f32 %v50, %v589
    %v591 = vand.u32 %v590, 4294901760
    %592 = vmatpush1.msra.mxu0 %v591
    %593 = vmatprep.subr.mxu0 0.0
    %v594 = vand.u32 %v51, 4294901760
    %v595 = vsub.f32 %v51, %v594
    %v596 = vand.u32 %v595, 4294901760
    %597 = vmatpush1.msra.mxu0 %v596
    %598 = vmatprep.subr.mxu0 0.0
    %599 = vmatpush1.msra.mxu0 0.0
    %600 = vmatprep.subr.mxu0 0.0
    %601 = vmatpush1.msra.mxu0 0.0
    %602 = vmatprep.subr.mxu0 0.0
    %603 = vmatpush1.msra.mxu0 0.0
    %604 = vmatprep.subr.mxu0 0.0
    %605 = vmatpush1.msra.mxu0 0.0
    %606 = vmatprep.subr.mxu0 0.0
    %607 = vmatpush1.msra.mxu0 0.0
    %608 = vmatprep.subr.mxu0 0.0
    %609 = vmatpush1.msra.mxu0 0.0
    %610 = vmatprep.subr.mxu0 0.0
    %611 = vmatpush1.msra.mxu0 0.0
    %612 = vmatprep.subr.mxu0 0.0
    %613 = vmatpush1.msra.mxu0 0.0
    %614 = vmatprep.subr.mxu0 0.0
    %615 = vmatpush1.msra.mxu0 0.0
    %616 = vmatprep.subr.mxu0 0.0
    %617 = vmatpush1.msra.mxu0 0.0
    %618 = vmatprep.subr.mxu0 0.0
    %619 = vmatpush1.msra.mxu0 0.0
    %620 = vmatprep.subr.mxu0 0.0
    %621 = vmatpush1.msra.mxu0 0.0
    %622 = vmatprep.subr.mxu0 0.0
    %623 = vmatpush1.msra.mxu0 0.0
    %624 = vmatprep.subr.mxu0 0.0
    %625 = vmatpush1.msra.mxu0 0.0
    %626 = vmatprep.subr.mxu0 0.0
    %627 = vmatpush1.msra.mxu0 0.0
    %628 = vmatprep.subr.mxu0 0.0
    %629 = vmatpush1.msra.mxu0 0.0
    %630 = vmatprep.mubr.f32.mxu0 0.0
    %v631 = vand.u32 %v34, 4294901760
    %632 = vmatmul.mubr.f32.gmra.mrb[0].mxu0 %v631
    %v633 = vpop.f32.mrb[0].mxu0
    %v634 = vadd.f32 %v507, %v633
    %v635 = vpop.f32.mrb[0].mxu0
    %636 = vmatprep.mubr.f32.mxu0 0.0
    %v637 = vand.u32 %v35, 4294901760
    %638 = vmatmul.mubr.f32.gmra.mrb[0].mxu0 %v637
    %v639 = vpop.f32.mrb[0].mxu0
    %v640 = vadd.f32 %v515, %v639
    %v641 = vpop.f32.mrb[0].mxu0
    %642 = vdwg.mxu0
    %643 = vmatprep.subr.mxu0 0.0
    %v644 = vand.u32 %v36, 4294901760
    %645 = vmatpush1.msra.mxu0 %v644
    %646 = vmatprep.subr.mxu0 0.0
    %v647 = vand.u32 %v37, 4294901760
    %648 = vmatpush1.msra.mxu0 %v647
    %649 = vmatprep.subr.mxu0 0.0
    %v650 = vand.u32 %v38, 4294901760
    %651 = vmatpush1.msra.mxu0 %v650
    %652 = vmatprep.subr.mxu0 0.0
    %v653 = vand.u32 %v39, 4294901760
    %654 = vmatpush1.msra.mxu0 %v653
    %655 = vmatprep.subr.mxu0 0.0
    %v656 = vand.u32 %v40, 4294901760
    %657 = vmatpush1.msra.mxu0 %v656
    %658 = vmatprep.subr.mxu0 0.0
    %v659 = vand.u32 %v41, 4294901760
    %660 = vmatpush1.msra.mxu0 %v659
    %661 = vmatprep.subr.mxu0 0.0
    %v662 = vand.u32 %v42, 4294901760
    %663 = vmatpush1.msra.mxu0 %v662
    %664 = vmatprep.subr.mxu0 0.0
    %v665 = vand.u32 %v43, 4294901760
    %666 = vmatpush1.msra.mxu0 %v665
    %667 = vmatprep.subr.mxu0 0.0
    %v668 = vand.u32 %v44, 4294901760
    %669 = vmatpush1.msra.mxu0 %v668
    %670 = vmatprep.subr.mxu0 0.0
    %v671 = vand.u32 %v45, 4294901760
    %672 = vmatpush1.msra.mxu0 %v671
    %673 = vmatprep.subr.mxu0 0.0
    %v674 = vand.u32 %v46, 4294901760
    %675 = vmatpush1.msra.mxu0 %v674
    %676 = vmatprep.subr.mxu0 0.0
    %v677 = vand.u32 %v47, 4294901760
    %678 = vmatpush1.msra.mxu0 %v677
    %679 = vmatprep.subr.mxu0 0.0
    %v680 = vand.u32 %v48, 4294901760
    %681 = vmatpush1.msra.mxu0 %v680
    %682 = vmatprep.subr.mxu0 0.0
    %v683 = vand.u32 %v49, 4294901760
    %684 = vmatpush1.msra.mxu0 %v683
    %685 = vmatprep.subr.mxu0 0.0
    %v686 = vand.u32 %v50, 4294901760
    %687 = vmatpush1.msra.mxu0 %v686
    %688 = vmatprep.subr.mxu0 0.0
    %v689 = vand.u32 %v51, 4294901760
    %690 = vmatpush1.msra.mxu0 %v689
    %691 = vmatprep.subr.mxu0 0.0
    %692 = vmatpush1.msra.mxu0 0.0
    %693 = vmatprep.subr.mxu0 0.0
    %694 = vmatpush1.msra.mxu0 0.0
    %695 = vmatprep.subr.mxu0 0.0
    %696 = vmatpush1.msra.mxu0 0.0
    %697 = vmatprep.subr.mxu0 0.0
    %698 = vmatpush1.msra.mxu0 0.0
    %699 = vmatprep.subr.mxu0 0.0
    %700 = vmatpush1.msra.mxu0 0.0
    %701 = vmatprep.subr.mxu0 0.0
    %702 = vmatpush1.msra.mxu0 0.0
    %703 = vmatprep.subr.mxu0 0.0
    %704 = vmatpush1.msra.mxu0 0.0
    %705 = vmatprep.subr.mxu0 0.0
    %706 = vmatpush1.msra.mxu0 0.0
    %707 = vmatprep.subr.mxu0 0.0
    %708 = vmatpush1.msra.mxu0 0.0
    %709 = vmatprep.subr.mxu0 0.0
    %710 = vmatpush1.msra.mxu0 0.0
    %711 = vmatprep.subr.mxu0 0.0
    %712 = vmatpush1.msra.mxu0 0.0
    %713 = vmatprep.subr.mxu0 0.0
    %714 = vmatpush1.msra.mxu0 0.0
    %715 = vmatprep.subr.mxu0 0.0
    %716 = vmatpush1.msra.mxu0 0.0
    %717 = vmatprep.subr.mxu0 0.0
    %718 = vmatpush1.msra.mxu0 0.0
    %719 = vmatprep.subr.mxu0 0.0
    %720 = vmatpush1.msra.mxu0 0.0
    %721 = vmatprep.subr.mxu0 0.0
    %722 = vmatpush1.msra.mxu0 0.0
    %723 = vmatprep.mubr.f32.mxu0 0.0
    %v724 = vand.u32 %v34, 4294901760
    %725 = vmatmul.mubr.f32.gmra.mrb[0].mxu0 %v724
    %v726 = vpop.f32.mrb[0].mxu0
    %v727 = vadd.f32 %v634, %v726
    %v728 = vpop.f32.mrb[0].mxu0
    %729 = vmatprep.mubr.f32.mxu0 0.0
    %v730 = vand.u32 %v35, 4294901760
    %731 = vmatmul.mubr.f32.gmra.mrb[0].mxu0 %v730
    %v732 = vpop.f32.mrb[0].mxu0
    %v733 = vadd.f32 %v640, %v732
    %v734 = vpop.f32.mrb[0].mxu0
    %735 = vdwg.mxu0
    %vm736 = vcmask 261120
    %737 = vst.msk [vmem:[#allocation2] sm:$0xff] %vm736, %v727
    %738 = vst.msk [vmem:[#allocation2 + $0x8] sm:$0xff] %vm736, %v733
    // Predicated region
    $region10: #{tpu_custom_call.1} parent=1 // pred_check
      _
    $region11: #{tpu_custom_call.1} parent=1 // pred_check_branch
      %740 = sbr.rel (0) target = $region13
    $region12: #{tpu_custom_call.1} parent=1 // pred_region
      %s742 = ssub.s32 256, 256
      %743 = vsyncadd [#allocation3], %s742
      %s744 = sshll.u32 [#allocation2], 4
      %s745 = int_to_ptr.vmem [resolvable:$true] %s744
      %750 = dma.vmem_to_hbm [thread:$0]  %s745, 256, %s2, [#allocation3], 128, 128, 8
    $region13: #{tpu_custom_call.1} parent=1 // pred_fallthru
      _
    // Predicated region
    $region14: #{tpu_custom_call.1} parent=1 // pred_check
      _
    $region15: #{tpu_custom_call.1} parent=1 // pred_check_branch
      %752 = sbr.rel (0) target = $region17
    $region16: #{tpu_custom_call.1} parent=1 // pred_region
      %753 = dma.done [#allocation3], 256
    $region17: #{tpu_custom_call.1} parent=1 // pred_fallthru
      _
    %754 = vsyncpa [#allocation3], 1

</llo_original>
